<compile_context>
chip_gen: v5e
topology: v5e:2x2
jax: 0.10.0
libtpu: 0.0.40
codegen_flags: <defaults>
</compile_context>

<pallas_src>
import functools

import jax
import jax.numpy as jnp
from jax.experimental import pallas as pl
from jax.experimental.pallas import tpu as pltpu

_LANES = 128
_SUBLANES = 8
_DEFAULT_BLOCK_ROWS = 2048  # 2048*128*4 B = 1 MiB f32 tile; fits all TPU generations.


def _focal_loss_kernel(n_ref, x_ref, t_ref, o_ref, *, alpha, gamma):
    """One grid step: focal-loss terms for a (block_rows, 128) tile, reduced to (8, 128)."""
    pid = pl.program_id(0)
    last = pl.num_programs(0) - 1

    x = x_ref[...].astype(jnp.float32)
    t = t_ref[...].astype(jnp.float32)  # bf16 {0,1} labels -> exact in f32

    # Numerically-stable BCE-with-logits (matches PyTorch):
    #   bce = max(x, 0) - x*t + log(1 + exp(-|x|))
    z = jnp.exp(-jnp.abs(x))                       # single EUP exp, reused below
    bce = jnp.maximum(x, 0.0) - x * t + jnp.log1p(z)

    # pt = exp(-bce) = exp(x*t - max(x,0)) / (1 + z).  For binary targets the
    # numerator is exactly 1 (when sign(x>=0) "matches" the label) or z, so no
    # second exp is needed.
    numer = jnp.where(
        x >= 0.0,
        jnp.where(t >= 0.5, 1.0, z),
        jnp.where(t >= 0.5, z, 1.0),
    )
    pt = numer / (1.0 + z)

    # (1 - pt) ** gamma  -- integer gamma becomes repeated multiplies (VALU),
    # avoiding the exp+log pair that jnp.power would emit on the single EUP slot.
    m = 1.0 - pt
    g = float(gamma)
    if g == int(g) and 0 <= int(g) <= 8:
        ig = int(g)
        if ig == 0:
            mp = jnp.ones_like(m)
        else:
            mp = m
            for _ in range(ig - 1):
                mp = mp * m
    else:
        mp = jnp.maximum(m, 0.0) ** g  # clamp guards log(negative) from fp rounding

    # at = alpha_table[targets.long()] with alpha_table = [alpha, 1 - alpha]
    at = jnp.where(t >= 1.0, 1.0 - alpha, alpha)

    f = at * mp * bce

    rows_blk, cols = f.shape  # static (block_rows, 128); block_rows % 8 == 0

    def _partial(v):
        # (block_rows, 128) -> (8, 128) via VALU adds over sublane groups.
        return jnp.sum(v.reshape(-1, _SUBLANES, cols), axis=0)

    @pl.when(pid != last)
    def _():  # interior blocks: all elements valid, no mask work
        o_ref[...] = _partial(f)

    @pl.when(pid == last)
    def _():  # tail block: mask padding / out-of-range rows before reducing
        base = pid * (rows_blk * cols)
        ridx = jax.lax.broadcasted_iota(jnp.int32, (rows_blk, cols), 0)
        cidx = jax.lax.broadcasted_iota(jnp.int32, (rows_blk, cols), 1)
        flat_idx = base + ridx * cols + cidx
        fm = jnp.where(flat_idx < n_ref[0], f, 0.0)
        o_ref[...] = _partial(fm)


def weighted_focal_loss(inputs, targets, alpha=0.25, gamma=2.0,
                        max_block_rows=_DEFAULT_BLOCK_ROWS):
    """Pallas TPU implementation of WeightedFocalLoss.forward.

    inputs, targets: same-shape float arrays (canonically 1-D logits / {0,1} labels).
    Returns an f32 scalar (mean focal loss).
    """
    assert inputs.shape == targets.shape
    n = int(inputs.size)
    assert n > 0

    x = inputs.reshape(-1).astype(jnp.float32)
    t = targets.reshape(-1).astype(jnp.float32)

    # Minimal, conditional padding so the vector reshapes to (rows, 128) with
    # rows % 8 == 0 (padded elements are masked out in the last grid block).
    chunk = _SUBLANES * _LANES  # 1024
    pad = (-n) % chunk
    if pad:
        x = jnp.pad(x, (0, pad))
        t = jnp.pad(t, (0, pad))
    rows = (n + pad) // _LANES
    x2 = x.reshape(rows, _LANES)
    t2 = t.reshape(rows, _LANES).astype(jnp.bfloat16)  # 2 B/elem labels, exact for {0,1}

    # Tile size: multiple of 16 (bf16 sublane packing) when actually tiling;
    # a single full-extent block otherwise.
    mbr = max(16, (int(max_block_rows) // 16) * 16)
    block_rows = rows if rows <= mbr else mbr
    num_blocks = pl.cdiv(rows, block_rows)

    n_arr = jnp.array([n], dtype=jnp.int32)  # SMEM scalar (scalar prefetch)

    kernel = functools.partial(_focal_loss_kernel, alpha=float(alpha), gamma=float(gamma))

    partials = pl.pallas_call(
        kernel,
        out_shape=jax.ShapeDtypeStruct((num_blocks * _SUBLANES, _LANES), jnp.float32),
        grid_spec=pltpu.PrefetchScalarGridSpec(
            num_scalar_prefetch=1,
            grid=(num_blocks,),
            in_specs=[
                pl.BlockSpec((block_rows, _LANES), lambda i, n_ref: (i, 0)),
                pl.BlockSpec((block_rows, _LANES), lambda i, n_ref: (i, 0)),
            ],
            out_specs=pl.BlockSpec((_SUBLANES, _LANES), lambda i, n_ref: (i, 0)),
        ),
        compiler_params=pltpu.CompilerParams(
            dimension_semantics=("parallel",),
        ),
    )(n_arr, x2, t2)

    # Final tiny cross-block reduction + mean (num_blocks*8*128 f32 values).
    return jnp.sum(partials) / jnp.float32(n)


def _reference(inputs, targets, alpha=0.25, gamma=2.0):
    x = inputs.reshape(-1).astype(jnp.float32)
    t = targets.reshape(-1).astype(jnp.float32)
    bce = jnp.maximum(x, 0.0) - x * t + jnp.log1p(jnp.exp(-jnp.abs(x)))
    at = jnp.where(t.astype(jnp.int32) >= 1, 1.0 - alpha, alpha)
    pt = jnp.exp(-bce)
    return jnp.mean(at * (1.0 - pt) ** gamma * bce)


if __name__ == "__main__":
    key = jax.random.PRNGKey(0)
    k1, k2, k3, k4 = jax.random.split(key, 4)

    # Case 1: N not a multiple of 1024 -> exercises padding + tail masking (single block).
    N1 = 2000
    x1 = jax.random.normal(k1, (N1,), dtype=jnp.float32) * 2.0
    t1 = jax.random.bernoulli(k2, p=0.3, shape=(N1,)).astype(jnp.float32)
    loss1 = jax.block_until_ready(weighted_focal_loss(x1, t1, alpha=0.25, gamma=2.0))
    ref1 = _reference(x1, t1, alpha=0.25, gamma=2.0)
    assert jnp.allclose(loss1, ref1, rtol=1e-5, atol=1e-6), (loss1, ref1)

    # Case 2: small block size -> exercises the multi-block grid, partial edge block,
    # per-block partial sums, and the scalar-prefetch mask on the last block only.
    N2 = 5000
    x2 = jax.random.normal(k3, (N2,), dtype=jnp.float32) * 3.0
    t2 = jax.random.bernoulli(k4, p=0.5, shape=(N2,)).astype(jnp.float32)
    loss2 = jax.block_until_ready(
        weighted_focal_loss(x2, t2, alpha=0.25, gamma=2.0, max_block_rows=16)
    )
    ref2 = _reference(x2, t2, alpha=0.25, gamma=2.0)
    assert jnp.allclose(loss2, ref2, rtol=1e-5, atol=1e-6), (loss2, ref2)

    print("KERNEL_OK")
</pallas_src>

<mosaic_0001>
module attributes {stable_mosaic.version = 11 : i64} {
  func.func @_focal_loss_kernel(%arg0: i32, %arg1: memref<1xi32, #tpu.memory_space<smem>>, %arg2: memref<16x128xf32, #tpu.memory_space<vmem>>, %arg3: memref<16x128xbf16, #tpu.memory_space<vmem>>, %arg4: memref<8x128xf32, #tpu.memory_space<vmem>>) attributes {dimension_semantics = [#tpu.dimension_semantics<parallel>], iteration_bounds = array<i64: 1>, scalar_prefetch = 1 : i64, scratch_operands = 0 : i64, tpu.core_type = #tpu.core_type<tc>, window_params = [{transform_indices = @transform_0, window_bounds = array<i64: 16, 128>}, {transform_indices = @transform_1, window_bounds = array<i64: 16, 128>}, {transform_indices = @transform_2, window_bounds = array<i64: 8, 128>}]} {
    %c0 = arith.constant 0 : index
    %c0_0 = arith.constant 0 : index
    %0 = vector.load %arg2[%c0, %c0_0] : memref<16x128xf32, #tpu.memory_space<vmem>>, vector<16x128xf32>
    %c0_1 = arith.constant 0 : index
    %c0_2 = arith.constant 0 : index
    %1 = vector.load %arg3[%c0_1, %c0_2] : memref<16x128xbf16, #tpu.memory_space<vmem>>, vector<16x128xbf16>
    %2 = arith.extf %1 : vector<16x128xbf16> to vector<16x128xf32>
    %3 = math.absf %0 : vector<16x128xf32>
    %cst = arith.constant 0.000000e+00 : f32
    %4 = vector.broadcast %cst : f32 to vector<16x128xf32>
    %5 = arith.subf %4, %3 : vector<16x128xf32>
    %6 = math.exp %5 : vector<16x128xf32>
    %cst_3 = arith.constant 0.000000e+00 : f32
    %7 = vector.broadcast %cst_3 : f32 to vector<16x128xf32>
    %8 = arith.maximumf %0, %7 : vector<16x128xf32>
    %9 = arith.mulf %0, %2 : vector<16x128xf32>
    %10 = arith.subf %8, %9 : vector<16x128xf32>
    %11 = math.log1p %6 : vector<16x128xf32>
    %12 = arith.addf %10, %11 : vector<16x128xf32>
    %cst_4 = arith.constant 0.000000e+00 : f32
    %13 = vector.broadcast %cst_4 : f32 to vector<16x128xf32>
    %14 = arith.cmpf oge, %0, %13 : vector<16x128xf32>
    %cst_5 = arith.constant 5.000000e-01 : f32
    %15 = vector.broadcast %cst_5 : f32 to vector<16x128xf32>
    %16 = arith.cmpf oge, %2, %15 : vector<16x128xf32>
    %cst_6 = arith.constant 1.000000e+00 : f32
    %17 = vector.broadcast %cst_6 : f32 to vector<16x128xf32>
    %18 = arith.select %16, %17, %6 : vector<16x128xi1>, vector<16x128xf32>
    %cst_7 = arith.constant 5.000000e-01 : f32
    %19 = vector.broadcast %cst_7 : f32 to vector<16x128xf32>
    %20 = arith.cmpf oge, %2, %19 : vector<16x128xf32>
    %cst_8 = arith.constant 1.000000e+00 : f32
    %21 = vector.broadcast %cst_8 : f32 to vector<16x128xf32>
    %22 = arith.select %20, %6, %21 : vector<16x128xi1>, vector<16x128xf32>
    %23 = arith.select %14, %18, %22 : vector<16x128xi1>, vector<16x128xf32>
    %cst_9 = arith.constant 1.000000e+00 : f32
    %24 = vector.broadcast %cst_9 : f32 to vector<16x128xf32>
    %25 = arith.addf %24, %6 : vector<16x128xf32>
    %26 = arith.divf %23, %25 : vector<16x128xf32>
    %cst_10 = arith.constant 1.000000e+00 : f32
    %27 = vector.broadcast %cst_10 : f32 to vector<16x128xf32>
    %28 = arith.subf %27, %26 : vector<16x128xf32>
    %29 = arith.mulf %28, %28 : vector<16x128xf32>
    %cst_11 = arith.constant 1.000000e+00 : f32
    %30 = vector.broadcast %cst_11 : f32 to vector<16x128xf32>
    %31 = arith.cmpf oge, %2, %30 : vector<16x128xf32>
    %cst_12 = arith.constant 7.500000e-01 : f32
    %cst_13 = arith.constant 2.500000e-01 : f32
    %32 = vector.broadcast %cst_12 : f32 to vector<16x128xf32>
    %33 = vector.broadcast %cst_13 : f32 to vector<16x128xf32>
    %34 = arith.select %31, %32, %33 : vector<16x128xi1>, vector<16x128xf32>
    %35 = arith.mulf %34, %29 : vector<16x128xf32>
    %36 = arith.mulf %35, %12 : vector<16x128xf32>
    %c0_i32 = arith.constant 0 : i32
    %37 = arith.cmpi ne, %arg0, %c0_i32 : i32
    %38 = arith.extui %37 : i1 to i32
    %c0_i32_14 = arith.constant 0 : i32
    %39 = arith.cmpi ne, %38, %c0_i32_14 : i32
    scf.if %39 {
      %43 = vector.shape_cast %36 : vector<16x128xf32> to vector<2x8x128xf32>
      %cst_17 = arith.constant dense<0.000000e+00> : vector<8x128xf32>
      %44 = vector.multi_reduction <add>, %43, %cst_17 [0] : vector<2x8x128xf32> to vector<8x128xf32>
      %c0_18 = arith.constant 0 : index
      %c0_19 = arith.constant 0 : index
      %45 = vector.load %arg4[%c0_18, %c0_19] : memref<8x128xf32, #tpu.memory_space<vmem>>, vector<8x128xf32>
      tpu.vector_store %arg4[%c0_18, %c0_19], %44 {strides = array<i32>} : memref<8x128xf32, #tpu.memory_space<vmem>>, vector<8x128xf32>,
    } else {
    }
    %c0_i32_15 = arith.constant 0 : i32
    %40 = arith.cmpi eq, %arg0, %c0_i32_15 : i32
    %41 = arith.extui %40 : i1 to i32
    %c0_i32_16 = arith.constant 0 : i32
    %42 = arith.cmpi ne, %41, %c0_i32_16 : i32
    scf.if %42 {
      %c2048_i32 = arith.constant 2048 : i32
      %43 = arith.muli %arg0, %c2048_i32 : i32
      %44 = tpu.iota {dimensions = array<i32: 0>} : vector<16x128xi32>
      %45 = tpu.iota {dimensions = array<i32: 1>} : vector<16x128xi32>
      %c128_i32 = arith.constant 128 : i32
      %46 = vector.broadcast %c128_i32 : i32 to vector<16x128xi32>
      %47 = arith.muli %44, %46 : vector<16x128xi32>
      %48 = vector.broadcast %43 : i32 to vector<16x128xi32>
      %49 = arith.addi %48, %47 : vector<16x128xi32>
      %50 = arith.addi %49, %45 : vector<16x128xi32>
      %c0_17 = arith.constant 0 : index
      %51 = memref.load %arg1[%c0_17] : memref<1xi32, #tpu.memory_space<smem>>
      %52 = vector.broadcast %51 : i32 to vector<16x128xi32>
      %53 = arith.cmpi slt, %50, %52 : vector<16x128xi32>
      %cst_18 = arith.constant 0.000000e+00 : f32
      %54 = vector.broadcast %cst_18 : f32 to vector<16x128xf32>
      %55 = arith.select %53, %36, %54 : vector<16x128xi1>, vector<16x128xf32>
      %56 = vector.shape_cast %55 : vector<16x128xf32> to vector<2x8x128xf32>
      %cst_19 = arith.constant dense<0.000000e+00> : vector<8x128xf32>
      %57 = vector.multi_reduction <add>, %56, %cst_19 [0] : vector<2x8x128xf32> to vector<8x128xf32>
      %c0_20 = arith.constant 0 : index
      %c0_21 = arith.constant 0 : index
      %58 = vector.load %arg4[%c0_20, %c0_21] : memref<8x128xf32, #tpu.memory_space<vmem>>, vector<8x128xf32>
      tpu.vector_store %arg4[%c0_20, %c0_21], %57 {strides = array<i32>} : memref<8x128xf32, #tpu.memory_space<vmem>>, vector<8x128xf32>,
    } else {
    }
    return
  }
  func.func @transform_0(%arg0: i32, %arg1: memref<1xi32, #tpu.memory_space<smem>>) -> (i32, i32) {
    %c0_i32 = arith.constant 0 : i32
    %c0_i32_0 = arith.constant 0 : i32
    return %arg0, %c0_i32 : i32, i32
  }
  func.func @transform_1(%arg0: i32, %arg1: memref<1xi32, #tpu.memory_space<smem>>) -> (i32, i32) {
    %c0_i32 = arith.constant 0 : i32
    %c0_i32_0 = arith.constant 0 : i32
    return %arg0, %c0_i32 : i32, i32
  }
  func.func @transform_2(%arg0: i32, %arg1: memref<1xi32, #tpu.memory_space<smem>>) -> (i32, i32) {
    %c0_i32 = arith.constant 0 : i32
    %c0_i32_0 = arith.constant 0 : i32
    return %arg0, %c0_i32 : i32, i32
  }
}

</mosaic_0001>

<llo_original>
// kernel: tpu_custom_call.1
$region0: #{tpu_custom_call.1}
  #allocation0 [shape = 'u32[]', space=smem, size = 0x4, offset = 0x4, fixed_abs, tag = 'smem constant byte address 0x4 - core index']
  #allocation1 [shape = 'u32[72,128]{1,0:T(1,128)}', space=vmem, size = 0x9000, scoped, tag = 'internal scratch']
  #allocation2 [shape = 's32[1]{0}', space=sflag, size = 0x4, scoped, tag = 'scoped memory for tpu_custom_call.1']
  #allocation3 [shape = 's32[1]{0:T(128)S(6)}', space=smem, size = 0x200, scoped, tag = 'prefetched SMEM operand 0']
  %s0 = inlined_call_operand.<no memory space> [shape: s32[1], index: 0, kind: input, shape index: {}]
  %s1 = inlined_call_operand.hbm [shape: f32[16,128], index: 1, kind: input, shape index: {}]
  %s2 = inlined_call_operand.hbm [shape: bf16[16,128], index: 2, kind: input, shape index: {}]
  %s3 = inlined_call_operand.hbm [shape: f32[8,128], index: 3, kind: output, shape index: {}]
  %s4 = sld [smem:[#allocation0]]
  $region34: #{tpu_custom_call.1} parent=0
    _
  %s6 = ssub.s32 1, %s4
  %s7 = scalar_select 0, %s6, %s4
  %8 = sst [smem:[#allocation3]] %s0
  $region1: #{tpu_custom_call.1} parent=0
    #allocation4 [shape = 'u8[8192]{0}', space=vmem, size = 0x2000, scoped, tag = 'input window, operand 1, single buffered']
    #allocation5 [shape = 's32[1]{0}', space=sflag, size = 0x4, scoped, tag = 'scoped memory for tpu_custom_call.1']
    #allocation6 [shape = 's32[1]{0}', space=sflag, size = 0x4, scoped, tag = 'scoped memory for tpu_custom_call.1']
    #allocation7 [shape = 'u8[4096]{0}', space=vmem, size = 0x1000, scoped, tag = 'input window, operand 2, single buffered']
    #allocation8 [shape = 's32[1]{0}', space=sflag, size = 0x4, scoped, tag = 'scoped memory for tpu_custom_call.1']
    #allocation9 [shape = 'u8[4096]{0}', space=vmem, size = 0x1000, scoped, tag = 'output window, operand 0, single buffered']
    %9 = vsyncpa [#allocation5], 0
    %10 = vsyncpa [#allocation8], 0
    %11 = vsyncpa [#allocation6], 0
    // Predicated region
    $region2: #{tpu_custom_call.1} parent=1 // pred_check
      _
    $region3: #{tpu_custom_call.1} parent=1 // pred_check_branch
      %13 = sbr.rel (0) target = $region5
    $region4: #{tpu_custom_call.1} parent=1 // pred_region
      %15 = vsyncadd [#allocation5], 0
      %s16 = sshll.u32 %s1, 4
      %s17 = int_to_ptr.hbm [resolvable:$true] %s16
      %s18 = sshll.u32 [#allocation4], 4
      %s19 = int_to_ptr.vmem [resolvable:$true] %s18
      %24 = dma.hbm_to_vmem [thread:$0]  %s17, 256, %s19, [#allocation5], 128, 128, 8
    $region5: #{tpu_custom_call.1} parent=1 // pred_fallthru
      _
    // Predicated region
    $region6: #{tpu_custom_call.1} parent=1 // pred_check
      _
    $region7: #{tpu_custom_call.1} parent=1 // pred_check_branch
      %26 = sbr.rel (0) target = $region9
    $region8: #{tpu_custom_call.1} parent=1 // pred_region
      %28 = vsyncadd [#allocation8], 0
      %s29 = sshll.u32 %s2, 4
      %s30 = int_to_ptr.hbm [resolvable:$true] %s29
      %s31 = sshll.u32 [#allocation7], 4
      %s32 = int_to_ptr.vmem [resolvable:$true] %s31
      %37 = dma.hbm_to_vmem [thread:$0]  %s30, 128, %s32, [#allocation8], 64, 64, 4
    $region9: #{tpu_custom_call.1} parent=1 // pred_fallthru
      _
    // Predicated region
    $region10: #{tpu_custom_call.1} parent=1 // pred_check
      _
    $region11: #{tpu_custom_call.1} parent=1 // pred_check_branch
      %39 = sbr.rel (0) target = $region13
    $region12: #{tpu_custom_call.1} parent=1 // pred_region
      %41 = dma.done [#allocation5], 256
    $region13: #{tpu_custom_call.1} parent=1 // pred_fallthru
      _
    // Predicated region
    $region14: #{tpu_custom_call.1} parent=1 // pred_check
      _
    $region15: #{tpu_custom_call.1} parent=1 // pred_check_branch
      %43 = sbr.rel (0) target = $region17
    $region16: #{tpu_custom_call.1} parent=1 // pred_region
      %45 = dma.done [#allocation8], 128
    $region17: #{tpu_custom_call.1} parent=1 // pred_fallthru
      _
    %v46 = vld [vmem:[#allocation4] sm:$0xff]
    %v47 = vld [vmem:[#allocation4 + $0x8] sm:$0xff]
    %v48 = vld [vmem:[#allocation7] sm:$0xf]
    %v49 = vld [vmem:[#allocation7 + $0x4] sm:$0xf]
    %v50 = vunpack.c.l.bf16 %v48
    %v51 = vunpack.c.l.bf16 %v49
    %v52 = vand.u32 2147483647, %v46
    %v53 = vand.u32 2147483647, %v47
    %v54 = vsub.f32 0.0, %v52
    %v55 = vsub.f32 0.0, %v53
    %v56 = vmul.f32 %v54, 1.442695
    %v57 = vpow.pop %v56
    %v58 = vmul.f32 %v55, 1.442695
    %v59 = vpow.pop %v58
    %v60 = vmax.f32 %v46, 0.0
    %v61 = vmax.f32 %v47, 0.0
    %v62 = vmul.f32 %v46, %v50
    %v63 = vmul.f32 %v47, %v51
    %v64 = vsub.f32 %v60, %v62
    %v65 = vsub.f32 %v61, %v63
    %v66 = vadd.f32 %v57, 1.0
    %v67 = vlog2.pop %v66
    %v68 = vmul.f32 %v67, 0.6931472
    %v69 = vmul.f32 -0.5, %v57
    %v70 = vadd.f32 %v69, 1.0
    %v71 = vmul.f32 %v70, %v57
    %v72 = vand.u32 2147483647, %v57
    %vm73 = vcmp.lt.f32.partialorder %v72, 0.0004427343
    %v74 = vsel %vm73, %v71, %v68
    %v75 = vadd.f32 %v59, 1.0
    %v76 = vlog2.pop %v75
    %v77 = vmul.f32 %v76, 0.6931472
    %v78 = vmul.f32 -0.5, %v59
    %v79 = vadd.f32 %v78, 1.0
    %v80 = vmul.f32 %v79, %v59
    %v81 = vand.u32 2147483647, %v59
    %vm82 = vcmp.lt.f32.partialorder %v81, 0.0004427343
    %v83 = vsel %vm82, %v80, %v77
    %v84 = vadd.f32 %v64, %v74
    %v85 = vadd.f32 %v65, %v83
    %vm86 = vcmp.ge.f32.partialorder %v46, 0.0
    %vm87 = vcmp.ge.f32.partialorder %v47, 0.0
    %vm88 = vcmp.ge.f32.partialorder %v50, 0.5
    %vm89 = vcmp.ge.f32.partialorder %v51, 0.5
    %v90 = vsel %vm88, 1.0, %v57
    %v91 = vsel %vm89, 1.0, %v59
    %v92 = vsel %vm88, %v57, 1.0
    %v93 = vsel %vm89, %v59, 1.0
    %v94 = vsel %vm86, %v90, %v92
    %v95 = vsel %vm87, %v91, %v93
    %v96 = vadd.f32 %v57, 1.0
    %v97 = vadd.f32 %v59, 1.0
    %v98 = vrcp.pop %v96
    %v99 = vmul.f32 %v96, %v98
    %v100 = vsub.f32 1.0, %v99
    %v101 = vmul.f32 %v98, %v100
    %v102 = vadd.f32 %v98, %v101
    %vm103 = vweird.f32 %v96
    %vm104 = vweird.f32 %v98
    %vm105 = vmor %vm103, %vm104
    %v106 = vsel %vm105, %v98, %v102
    %v107 = vand.u32 2147483647, %v96
    %vm108 = vcmp.eq.f32.partialorder %v107, 8.507059e+37
    %v109 = vand.u32 %v96, 2147483648
    %v110 = vor.u32 1.1754944e-38, %v109
    %v111 = vsel %vm108, %v110, %v106
    %v112 = vmul.f32 %v94, %v111
    %v113 = vrcp.pop %v97
    %v114 = vmul.f32 %v97, %v113
    %v115 = vsub.f32 1.0, %v114
    %v116 = vmul.f32 %v113, %v115
    %v117 = vadd.f32 %v113, %v116
    %vm118 = vweird.f32 %v97
    %vm119 = vweird.f32 %v113
    %vm120 = vmor %vm118, %vm119
    %v121 = vsel %vm120, %v113, %v117
    %v122 = vand.u32 2147483647, %v97
    %vm123 = vcmp.eq.f32.partialorder %v122, 8.507059e+37
    %v124 = vand.u32 %v97, 2147483648
    %v125 = vor.u32 1.1754944e-38, %v124
    %v126 = vsel %vm123, %v125, %v121
    %v127 = vmul.f32 %v95, %v126
    %v128 = vsub.f32 1.0, %v112
    %v129 = vsub.f32 1.0, %v127
    %v130 = vmul.f32 %v128, %v128
    %v131 = vmul.f32 %v129, %v129
    %vm132 = vcmp.ge.f32.partialorder %v50, 1.0
    %vm133 = vcmp.ge.f32.partialorder %v51, 1.0
    %v134 = vsel %vm132, 0.75, 0.25
    %v135 = vsel %vm133, 0.75, 0.25
    %v136 = vmul.f32 %v134, %v130
    %v137 = vmul.f32 %v135, %v131
    %v138 = vmul.f32 %v136, %v84
    %v139 = vmul.f32 %v137, %v85
    %p140 = scmp.ne.s32.totalorder 0, 0
    // Predicated region
    $region18: #{tpu_custom_call.1} parent=1 // pred_check
      %p141 = pneg %p140
    $region19: #{tpu_custom_call.1} parent=1 // pred_check_branch
      %143 = sbr.rel (%p141) target = $region21
    $region20: #{tpu_custom_call.1} parent=1 // pred_region
      %v144 = vadd.f32 %v138, %v139
      %145 = vst [vmem:[#allocation9] sm:$0xff] %v144
    $region21: #{tpu_custom_call.1} parent=1 // pred_fallthru
      _
    %p146 = scmp.eq.s32.totalorder 0, 0
    // Predicated region
    $region22: #{tpu_custom_call.1} parent=1 // pred_check
      %p147 = pneg %p146
    $region23: #{tpu_custom_call.1} parent=1 // pred_check_branch
      %149 = sbr.rel (%p147) target = $region25
    $region24: #{tpu_custom_call.1} parent=1 // pred_region
      %s150 = smul.u32 0, 2048
      %v151 = vlaneseq
      %v152 = vshrl.u32 %v151, 7
      %v153 = vadd.s32 %v152, 8
      %v154 = vlaneseq
      %v155 = vand.u32 %v154, 127
      %v156 = vmul.u32 %v152, 128
      %v157 = vmul.u32 %v153, 128
      %v158 = vstv %s150
      %v159 = vadd.s32 %v158, %v156
      %v160 = vadd.s32 %v158, %v157
      %v161 = vadd.s32 %v159, %v155
      %v162 = vadd.s32 %v160, %v155
      %s163 = sld [smem:[#allocation3]]
      %v164 = vstv %s163
      %vm165 = vcmp.lt.s32.totalorder %v161, %v164
      %vm166 = vcmp.lt.s32.totalorder %v162, %v164
      %v167 = vsel %vm165, %v138, 0.0
      %v168 = vsel %vm166, %v139, 0.0
      %v169 = vadd.f32 %v167, %v168
      %170 = vst [vmem:[#allocation9] sm:$0xff] %v169
    $region25: #{tpu_custom_call.1} parent=1 // pred_fallthru
      _
    // Predicated region
    $region26: #{tpu_custom_call.1} parent=1 // pred_check
      _
    $region27: #{tpu_custom_call.1} parent=1 // pred_check_branch
      %172 = sbr.rel (0) target = $region29
    $region28: #{tpu_custom_call.1} parent=1 // pred_region
      %174 = vsyncadd [#allocation6], 0
      %s176 = sshll.u32 [#allocation9], 4
      %s177 = int_to_ptr.vmem [resolvable:$true] %s176
      %s178 = sshll.u32 %s3, 4
      %s179 = int_to_ptr.hbm [resolvable:$true] %s178
      %181 = dma.vmem_to_hbm [thread:$0]  %s177, 128, %s179, [#allocation6]
    $region29: #{tpu_custom_call.1} parent=1 // pred_fallthru
      _
    // Predicated region
    $region30: #{tpu_custom_call.1} parent=1 // pred_check
      _
    $region31: #{tpu_custom_call.1} parent=1 // pred_check_branch
      %183 = sbr.rel (0) target = $region33
    $region32: #{tpu_custom_call.1} parent=1 // pred_region
      %185 = dma.done [#allocation6], 128
    $region33: #{tpu_custom_call.1} parent=1 // pred_fallthru
      _
    %186 = vsyncpa [#allocation5], 1
    %187 = vsyncpa [#allocation8], 1
    %188 = vsyncpa [#allocation6], 1

</llo_original>
